<compile_context>
chip_gen: v7x
topology: tpu7x:2x2x1
jax: 0.10.0
libtpu: 0.0.40
codegen_flags: <defaults>
</compile_context>

<pallas_src>
import math
import functools

import jax
import jax.numpy as jnp
from jax.experimental import pallas as pl
from jax.experimental.pallas import tpu as pltpu


def _round_up(x, m):
    return ((x + m - 1) // m) * m


def _vmem_cap(nbytes):
    # Explicit scoped-VMEM limit: 2x estimated footprint + margin, kept under
    # v7x's 64 MiB physical VMEM per TensorCore.
    return int(min(2 * nbytes + (8 << 20), 64 * 1024 * 1024))


_GATHER_UNROLL = 8


# ---------------------------------------------------------------------------
# Kernel 1: tiled dense projection  out = x @ W + b   (row-tiled, "parallel")
# ---------------------------------------------------------------------------
def _proj_kernel(x_ref, w_ref, b_ref, o_ref):
    o_ref[...] = (
        jnp.dot(x_ref[...], w_ref[...], preferred_element_type=jnp.float32)
        + b_ref[...]
    )


def _project(x, w, b, tile_rows):
    rows, in_dim = x.shape
    out_cols = w.shape[1]
    est = 4 * (2 * tile_rows * in_dim + 2 * in_dim * out_cols
               + 2 * out_cols + 2 * tile_rows * out_cols)
    return pl.pallas_call(
        _proj_kernel,
        out_shape=jax.ShapeDtypeStruct((rows, out_cols), jnp.float32),
        grid=(rows // tile_rows,),
        in_specs=[pl.BlockSpec((tile_rows, in_dim), lambda i: (i, 0)),
                  pl.BlockSpec((in_dim, out_cols), lambda i: (0, 0)),
                  pl.BlockSpec((1, out_cols), lambda i: (0, 0))],
        out_specs=pl.BlockSpec((tile_rows, out_cols), lambda i: (i, 0)),
        compiler_params=pltpu.CompilerParams(
            dimension_semantics=("parallel",),
            vmem_limit_bytes=_vmem_cap(est)),
    )(x, w, b)


# ---------------------------------------------------------------------------
# Kernel 2: edge attention — gather, edge math, exp, in-tile dst pre-reduction
#           (MXU), one accumulator RMW per unique destination per tile.
# ---------------------------------------------------------------------------
def _edge_kernel(TE, HDp, inv_scale,
                 src_sm, dst_sm, urow_sm, udst_sm, nuniq_sm,      # SMEM prefetch
                 qkv_ref, pe_ref, dcol_ref, drow_ref, hsum_ref,   # inputs
                 eout_ref, hout_ref,                              # outputs
                 gbuf, red, acc):                                 # VMEM scratch
    t = pl.program_id(0)
    nt = pl.num_programs(0)
    base = t * TE

    @pl.when(t == 0)
    def _init():
        acc[...] = jnp.zeros_like(acc)

    # ---- gather Q[dst] | (K|V)[src] rows from the resident qkv block --------
    # qkv lanes: [ Q (HDp) | K (HDp) | V (HDp) ]; K|V adjacent -> one fused read.
    # Manually unrolled x8; SMEM index reads hoisted ahead of the row copies.
    def gather_body(blk, carry):
        i0 = blk * _GATHER_UNROLL
        d_idx = [dst_sm[base + i0 + u] for u in range(_GATHER_UNROLL)]
        s_idx = [src_sm[base + i0 + u] for u in range(_GATHER_UNROLL)]
        for u in range(_GATHER_UNROLL):
            gbuf[pl.ds(i0 + u, 1), pl.ds(0, HDp)] = (
                qkv_ref[pl.ds(d_idx[u], 1), pl.ds(0, HDp)])
        for u in range(_GATHER_UNROLL):
            gbuf[pl.ds(i0 + u, 1), pl.ds(HDp, 2 * HDp)] = (
                qkv_ref[pl.ds(s_idx[u], 1), pl.ds(HDp, 2 * HDp)])
        return carry

    jax.lax.fori_loop(0, TE // _GATHER_UNROLL, gather_body, 0)

    q_dst = gbuf[:, 0:HDp]
    k_src = gbuf[:, HDp:2 * HDp]
    v_src = gbuf[:, 2 * HDp:3 * HDp]

    # ---- edge math (VPU) + per-head sum/broadcast (block-diag MXU) ----------
    score_vec = k_src * q_dst * inv_scale * pe_ref[...]           # [TE, HDp]
    eout_ref[...] = score_vec                                     # e_out (pre-exp)
    s_b = jnp.dot(score_vec, hsum_ref[...], preferred_element_type=jnp.float32)
    s_b = jnp.exp(jnp.clip(s_b, -5.0, 5.0))                       # [TE, HDp]

    # Per-edge [wV | z] contribution built as ONE full-width value.
    contrib = jnp.concatenate([v_src * s_b, s_b], axis=-1)        # [TE, 2*HDp]

    # ---- in-tile pre-reduction by destination (MXU) --------------------------
    # S[i, j] = (dst[i] == dst[j]); since edges are dst-sorted, every row of a
    # same-dst segment receives that segment's full sum.
    S = (dcol_ref[...] == drow_ref[...]).astype(jnp.float32)      # [TE, TE]
    red[...] = jnp.dot(S, contrib, preferred_element_type=jnp.float32)

    # ---- one accumulator RMW per unique destination in this tile -------------
    n_uniq = nuniq_sm[t]

    def rmw_body(j, carry):
        r = urow_sm[base + j]            # local row holding the segment sum
        d = udst_sm[base + j]            # destination node row (N = garbage row)
        acc[pl.ds(d, 1), :] = acc[pl.ds(d, 1), :] + red[pl.ds(r, 1), :]
        return carry

    jax.lax.fori_loop(0, n_uniq, rmw_body, 0)

    # ---- finalize: h_out = wV / (z + 1e-6), written once on the last tile ----
    @pl.when(t == nt - 1)
    def _fin():
        wv = acc[:, 0:HDp]
        z = acc[:, HDp:2 * HDp]
        hout_ref[...] = wv * pl.reciprocal(z + 1e-6, approx=True)


def _build_edge_call(Np, Ep, TE, HDp, inv_scale, single_buffer):
    # Single-buffer the constant-index resident blocks when supported.
    resident_kw = {"pipeline_mode": pl.Buffered(1)} if single_buffer else {}

    est = 4 * (2 * Np * 3 * HDp          # qkv (worst case: double-buffered)
               + 2 * TE * HDp            # pe tiles
               + 2 * TE * 128            # dst column (lane-padded)
               + 2 * 8 * TE              # dst row (sublane-padded)
               + 2 * HDp * HDp           # head-sum matrix
               + 2 * TE * HDp            # e_out tiles
               + 2 * Np * HDp            # h_out (resident)
               + TE * 3 * HDp + TE * 2 * HDp + Np * 2 * HDp)   # scratch

    grid_spec = pltpu.PrefetchScalarGridSpec(
        num_scalar_prefetch=5,           # src, dst, uniq_row, uniq_dst, n_uniq
        grid=(Ep // TE,),
        in_specs=[
            pl.BlockSpec((Np, 3 * HDp),
                         lambda t, s, d, ur, ud, nu: (0, 0), **resident_kw),
            pl.BlockSpec((TE, HDp), lambda t, s, d, ur, ud, nu: (t, 0)),
            pl.BlockSpec((TE, 1), lambda t, s, d, ur, ud, nu: (t, 0)),
            pl.BlockSpec((1, TE), lambda t, s, d, ur, ud, nu: (0, t)),
            pl.BlockSpec((HDp, HDp),
                         lambda t, s, d, ur, ud, nu: (0, 0), **resident_kw),
        ],
        out_specs=(
            pl.BlockSpec((TE, HDp), lambda t, s, d, ur, ud, nu: (t, 0)),   # e_out
            pl.BlockSpec((Np, HDp), lambda t, s, d, ur, ud, nu: (0, 0)),   # h_out
        ),
        scratch_shapes=[
            pltpu.VMEM((TE, 3 * HDp), jnp.float32),   # gathered [Q_dst|K_src|V_src]
            pltpu.VMEM((TE, 2 * HDp), jnp.float32),   # in-tile reduced [wV | z]
            pltpu.VMEM((Np, 2 * HDp), jnp.float32),   # node accumulator [wV | z]
        ],
    )
    kernel = functools.partial(_edge_kernel, TE, HDp, inv_scale)
    # TODO(synk): with dst-range-partitioned edges this axis could be split
    # "parallel" across v7x's two TensorCores; kept sequential here.
    return pl.pallas_call(
        kernel,
        out_shape=(jax.ShapeDtypeStruct((Ep, HDp), jnp.float32),
                   jax.ShapeDtypeStruct((Np, HDp), jnp.float32)),
        grid_spec=grid_spec,
        compiler_params=pltpu.CompilerParams(
            dimension_semantics=("arbitrary",),
            vmem_limit_bytes=_vmem_cap(est)),
    )


# ---------------------------------------------------------------------------
# Wrapper
# ---------------------------------------------------------------------------
def multi_head_attention(h, e, src, dst, params, *, num_heads, out_dim):
    """Returns (h_out [N,H,D], e_out [E,H,D]) matching the PyTorch module."""
    f32, i32 = jnp.float32, jnp.int32
    N, in_dim = h.shape
    E = e.shape[0]
    H, D = num_heads, out_dim
    HD = H * D
    HDp = _round_up(HD, 128)          # lane-dense padded head*dim width

    h = h.astype(f32)
    e = e.astype(f32)
    src = jnp.asarray(src, i32).reshape(E)
    dst = jnp.asarray(dst, i32).reshape(E)

    # ---- tiling (Np > N so row N is a dedicated garbage accumulator row) ----
    TN = 128 if N + 1 >= 128 else _round_up(N + 1, 8)
    Np = _round_up(N + 1, TN)
    if E >= 256:
        TE = 256                      # 256-wide MXU on v6e/v7x; sweep 128-512
    elif E >= 128:
        TE = 128
    else:
        TE = _round_up(max(E, 8), 8)
    Ep = _round_up(E, TE)
    nt_e = Ep // TE

    # ---- sort edges by destination; pad with the garbage destination row N ----
    perm = jnp.argsort(dst)
    inv_perm = jnp.argsort(perm)
    src_s = jnp.pad(src[perm], (0, Ep - E))                        # pad src: valid row 0
    dst_s = jnp.pad(dst[perm], (0, Ep - E), constant_values=N)     # pad dst: garbage row
    e_s = jnp.pad(e[perm], ((0, Ep - E), (0, 0)))

    # ---- per-tile unique-destination bookkeeping (cheap O(E) jnp) ----
    local = jnp.arange(Ep, dtype=i32) % TE
    prev = jnp.concatenate([jnp.full((1,), -1, i32), dst_s[:-1]])
    is_head = (local == 0) | (dst_s != prev)
    is_head_2d = is_head.reshape(nt_e, TE)
    n_uniq = jnp.sum(is_head_2d, axis=1).astype(i32)               # [nt_e]
    rank = jnp.cumsum(is_head_2d.astype(i32), axis=1) - 1          # [nt_e, TE]
    tgt = (jnp.arange(nt_e, dtype=i32)[:, None] * TE + rank).reshape(-1)
    tgt = jnp.where(is_head, tgt, nt_e * TE)                       # OOB -> dropped
    uniq_row = jnp.zeros((nt_e * TE,), i32).at[tgt].set(local, mode="drop")
    uniq_dst = jnp.full((nt_e * TE,), N, i32).at[tgt].set(dst_s, mode="drop")

    dcol = dst_s.reshape(Ep, 1)       # column/row copies for the equality matrix
    drow = dst_s.reshape(1, Ep)

    # ---- parameters: fused, lane-padded [Wq|Wk|Wv] and proj_e ----
    def pad_w(w):
        return jnp.pad(jnp.asarray(w, f32), ((0, 0), (0, HDp - HD)))

    def pad_b(b):
        return jnp.pad(jnp.asarray(b, f32).reshape(1, HD), ((0, 0), (0, HDp - HD)))

    w_qkv = jnp.concatenate(
        [pad_w(params["Wq"]), pad_w(params["Wk"]), pad_w(params["Wv"])], axis=1)
    b_qkv = jnp.concatenate(
        [pad_b(params["bq"]), pad_b(params["bk"]), pad_b(params["bv"])], axis=1)
    w_e = pad_w(params["We"])
    b_e = pad_b(params["be"])

    h_p = jnp.pad(h, ((0, Np - N), (0, 0)))

    # Block-diagonal "sum over D then broadcast across D" matrix [HDp, HDp].
    r = jnp.arange(HDp)
    hsum = (((r[:, None] // D) == (r[None, :] // D))
            & (r[:, None] < HD) & (r[None, :] < HD)).astype(f32)

    # ---- kernel 1: node Q|K|V projection and (hoisted) edge projection ----
    qkv = _project(h_p, w_qkv, b_qkv, TN)       # [Np, 3*HDp]
    pe = _project(e_s, w_e, b_e, TE)            # [Ep, HDp]  (dst-sorted order)

    # ---- kernel 2: edge attention + destination aggregation ----
    inv_scale = 1.0 / math.sqrt(out_dim)
    args = (src_s, dst_s, uniq_row, uniq_dst, n_uniq, qkv, pe, dcol, drow, hsum)
    try:
        e_out_s, h_out_p = _build_edge_call(Np, Ep, TE, HDp, inv_scale, True)(*args)
    except Exception:
        # pipeline_mode=pl.Buffered(1) not supported on this jax/libtpu:
        # fall back to default double-buffering of the resident blocks.
        e_out_s, h_out_p = _build_edge_call(Np, Ep, TE, HDp, inv_scale, False)(*args)

    e_out = e_out_s[:E, :HD][inv_perm].reshape(E, H, D)   # undo the dst-sort
    h_out = h_out_p[:N, :HD].reshape(N, H, D)
    return h_out, e_out


# ---------------------------------------------------------------------------
# Pure-JAX reference of the PyTorch/DGL forward pass
# ---------------------------------------------------------------------------
def reference_forward(h, e, src, dst, params, *, num_heads, out_dim):
    N = h.shape[0]
    H, D = num_heads, out_dim
    hi = jax.lax.Precision.HIGHEST
    Qh = (jnp.dot(h, params["Wq"], precision=hi) + params["bq"]).reshape(N, H, D)
    Kh = (jnp.dot(h, params["Wk"], precision=hi) + params["bk"]).reshape(N, H, D)
    Vh = (jnp.dot(h, params["Wv"], precision=hi) + params["bv"]).reshape(N, H, D)
    pe = (jnp.dot(e, params["We"], precision=hi) + params["be"]).reshape(-1, H, D)

    score_vec = Kh[src] * Qh[dst] / math.sqrt(out_dim) * pe          # [E,H,D]
    e_out = score_vec
    score = jnp.exp(jnp.clip(score_vec.sum(-1, keepdims=True), -5.0, 5.0))

    wV = jnp.zeros((N, H, D), jnp.float32).at[dst].add(Vh[src] * score)
    z = jnp.zeros((N, H, 1), jnp.float32).at[dst].add(score)
    h_out = wV / (z + 1e-6)
    return h_out, e_out


if __name__ == "__main__":
    # Small but multi-tile sizes: exercises dst-sorting, edge-tile grid, node
    # padding, the garbage row, and the unique-dst pre-reduction.
    N, E = 200, 600
    in_dim = 16
    num_heads, out_dim = 4, 8
    HD = num_heads * out_dim

    key = jax.random.PRNGKey(0)
    (k_h, k_e, kq, kk, kv, ke,
     kbq, kbk, kbv, kbe, ks, kd) = jax.random.split(key, 12)

    h = jax.random.normal(k_h, (N, in_dim), jnp.float32)
    e = jax.random.normal(k_e, (E, in_dim), jnp.float32)

    params = {
        "Wq": jax.random.normal(kq, (in_dim, HD), jnp.float32) * 0.1,
        "Wk": jax.random.normal(kk, (in_dim, HD), jnp.float32) * 0.1,
        "Wv": jax.random.normal(kv, (in_dim, HD), jnp.float32) * 0.1,
        "We": jax.random.normal(ke, (in_dim, HD), jnp.float32) * 0.1,
        "bq": jax.random.normal(kbq, (1, HD), jnp.float32) * 0.05,
        "bk": jax.random.normal(kbk, (1, HD), jnp.float32) * 0.05,
        "bv": jax.random.normal(kbv, (1, HD), jnp.float32) * 0.05,
        "be": jax.random.normal(kbe, (1, HD), jnp.float32) * 0.05,
    }

    # Random edge list (src -> dst), deterministic.
    src = jax.random.randint(ks, (E,), 0, N, dtype=jnp.int32)
    dst = jax.random.randint(kd, (E,), 0, N, dtype=jnp.int32)

    h_out, e_out = multi_head_attention(h, e, src, dst, params,
                                        num_heads=num_heads, out_dim=out_dim)
    h_out, e_out = jax.block_until_ready((h_out, e_out))

    h_exp, e_exp = reference_forward(h, e, src, dst, params,
                                     num_heads=num_heads, out_dim=out_dim)

    assert h_out.shape == (N, num_heads, out_dim)
    assert e_out.shape == (E, num_heads, out_dim)
    assert jnp.allclose(e_out, e_exp, atol=2e-3, rtol=2e-3), \
        float(jnp.max(jnp.abs(e_out - e_exp)))
    assert jnp.allclose(h_out, h_exp, atol=5e-3, rtol=1e-2), \
        float(jnp.max(jnp.abs(h_out - h_exp)))

    print("KERNEL_OK")
</pallas_src>

<mosaic_0001>
module attributes {stable_mosaic.version = 11 : i64} {
  func.func @_proj_kernel(%arg0: i32, %arg1: memref<128x16xf32, #tpu.memory_space<vmem>>, %arg2: memref<16x384xf32, #tpu.memory_space<vmem>>, %arg3: memref<1x384xf32, #tpu.memory_space<vmem>>, %arg4: memref<128x384xf32, #tpu.memory_space<vmem>>) attributes {dimension_semantics = [#tpu.dimension_semantics<parallel>], iteration_bounds = array<i64: 2>, scalar_prefetch = 0 : i64, scratch_operands = 0 : i64, tpu.core_type = #tpu.core_type<tc>, window_params = [{transform_indices = @transform_0, window_bounds = array<i64: 128, 16>}, {pipeline_mode = #tpu.pipeline_mode<synchronous>, transform_indices = @transform_1, window_bounds = array<i64: 16, 384>}, {pipeline_mode = #tpu.pipeline_mode<synchronous>, transform_indices = @transform_2, window_bounds = array<i64: 1, 384>}, {transform_indices = @transform_3, window_bounds = array<i64: 128, 384>}]} {
    %c0 = arith.constant 0 : index
    %c0_0 = arith.constant 0 : index
    %0 = vector.load %arg1[%c0, %c0_0] : memref<128x16xf32, #tpu.memory_space<vmem>>, vector<128x16xf32>
    %c0_1 = arith.constant 0 : index
    %c0_2 = arith.constant 0 : index
    %1 = vector.load %arg2[%c0_1, %c0_2] : memref<16x384xf32, #tpu.memory_space<vmem>>, vector<16x384xf32>
    %cst = arith.constant dense<0.000000e+00> : vector<128x384xf32>
    %2 = tpu.matmul %0, %1, %cst {dimension_numbers = #tpu.dot_dimension_numbers<[1], [0], [0], [1], [0, 0, 1, 1], [], []>} : vector<128x16xf32>, vector<16x384xf32>, vector<128x384xf32> -> vector<128x384xf32>
    %c0_3 = arith.constant 0 : index
    %c0_4 = arith.constant 0 : index
    %3 = vector.load %arg3[%c0_3, %c0_4] : memref<1x384xf32, #tpu.memory_space<vmem>>, vector<1x384xf32>
    %4 = vector.broadcast %3 : vector<1x384xf32> to vector<128x384xf32>
    %5 = arith.addf %2, %4 : vector<128x384xf32>
    %c0_5 = arith.constant 0 : index
    %c0_6 = arith.constant 0 : index
    %6 = vector.load %arg4[%c0_5, %c0_6] : memref<128x384xf32, #tpu.memory_space<vmem>>, vector<128x384xf32>
    tpu.vector_store %arg4[%c0_5, %c0_6], %5 {strides = array<i32>} : memref<128x384xf32, #tpu.memory_space<vmem>>, vector<128x384xf32>,
    return
  }
  func.func @transform_0(%arg0: i32) -> (i32, i32) {
    %c0_i32 = arith.constant 0 : i32
    %c0_i32_0 = arith.constant 0 : i32
    return %arg0, %c0_i32 : i32, i32
  }
  func.func @transform_1(%arg0: i32) -> (i32, i32) {
    %c0_i32 = arith.constant 0 : i32
    %c0_i32_0 = arith.constant 0 : i32
    %c0_i32_1 = arith.constant 0 : i32
    return %c0_i32, %c0_i32_0 : i32, i32
  }
  func.func @transform_2(%arg0: i32) -> (i32, i32) {
    %c0_i32 = arith.constant 0 : i32
    %c0_i32_0 = arith.constant 0 : i32
    %c0_i32_1 = arith.constant 0 : i32
    return %c0_i32, %c0_i32_0 : i32, i32
  }
  func.func @transform_3(%arg0: i32) -> (i32, i32) {
    %c0_i32 = arith.constant 0 : i32
    %c0_i32_0 = arith.constant 0 : i32
    return %arg0, %c0_i32 : i32, i32
  }
}

</mosaic_0001>

<llo_original>
// kernel: tpu_custom_call.1
$region0: #{tpu_custom_call.1}
  #allocation0 [shape = 'u32[]', space=smem, size = 0x4, offset = 0x4, fixed_abs, tag = 'smem constant byte address 0x4 - core index']
  #allocation1 [shape = 'u32[144,128]{1,0:T(1,128)}', space=vmem, size = 0x12000, scoped, tag = 'internal scratch']
  %s0 = inlined_call_operand.vmem [shape: f32[256,16], index: 0, kind: input, shape index: {}]
  %s1 = inlined_call_operand.vmem [shape: f32[16,384], index: 1, kind: input, shape index: {}]
  %s2 = inlined_call_operand.vmem [shape: f32[1,384], index: 2, kind: input, shape index: {}]
  %s3 = inlined_call_operand.hbm [shape: f32[256,384], index: 3, kind: output, shape index: {}]
  %s4 = sld [smem:[#allocation0]]
  $region45: #{tpu_custom_call.1} parent=0
    _
  %s6 = ssub.s32 1, %s4
  %s7 = scalar_select 0, %s6, %s4
  $region1: #{tpu_custom_call.1} parent=0
    #allocation2 [shape = 'u8[393216]{0}', space=vmem, size = 0x60000, scoped, tag = 'output window, operand 0']
    #allocation3 [shape = 's32[2]{0}', space=sflag, size = 0x8, scoped, tag = 'scoped memory for tpu_custom_call.1']
    %8 = vsyncpa [#allocation3], 0
    %s9 = scalar_lea.sflag [#allocation3], 1
    %10 = vsyncpa %s9, 0
    loop: start=0, step=1, limit=4
    $region2: #{tpu_custom_call.1} parent=1 // loop_pre_header
      _
    $region3: #{tpu_custom_call.1} parent=1 // loop_header
      %s12 = sphi 0, %s16
      %p13 = scmp.ge.s32.totalorder %s12, 4
      %s22 = sphi 0, %s24
      %s25 = sphi 0, %s22
      %s26 = sphi 0, %s25
      %s42 = sphi 0, %s26
      %s46 = sphi 0, %s46
      %s48 = sphi 0, %s46
      %s49 = sphi 0, %s48
      %s63 = sphi 0, %s49
      %s67 = sphi 0, %s67
      %s69 = sphi 0, %s67
      %s70 = sphi 0, %s69
      %s84 = sphi 0, %s70
      %s90 = sphi 0, %s92
      %s93 = sphi 0, %s90
      %s94 = sphi 0, %s93
      %s110 = sphi 0, %s94
    $region4: #{tpu_custom_call.1} parent=1 // loop_header_branch
      %15 = sbr.rel (%p13) target = $region8
    $region5: #{tpu_custom_call.1} parent=1 // loop_body
      %s17 = ssub.s32 %s12, 1
      %s18 = ssub.s32 %s12, 2
      %s19 = sadd.s32 %s12, 1
      %s20 = ssub.s32 %s12, %s19
      %p21 = scmp.eq.s32.totalorder %s20, 0
      %s23 = sadd.s32 %s22, 1
      %s24 = scalar_select %p21, %s22, %s23
      %p27 = pneg %p21
      %p28 = scmp.eq.s32.totalorder %s12, 1
      %p29 = por %p27, %p28
      %p30 = scmp.ne.s32.totalorder %s22, %s25
      %p31 = scmp.eq.s32.totalorder %s12, 0
      %p32 = por %p30, %p31
      %p33 = scmp.ne.s32.totalorder %s22, %s25
      %p34 = scmp.eq.s32.totalorder %s17, 1
      %p35 = por %p33, %p34
      %p36 = scmp.ne.s32.totalorder %s25, %s26
      %p37 = scmp.eq.s32.totalorder %s17, 0
      %p38 = por %p36, %p37
      %p39 = scmp.ne.s32.totalorder %s25, %s26
      %p40 = scmp.eq.s32.totalorder %s18, 1
      %p41 = por %p39, %p40
      %p43 = scmp.ne.s32.totalorder %s26, %s42
      %p44 = scmp.eq.s32.totalorder %s18, 0
      %p45 = por %p43, %p44
      %s47 = sadd.s32 %s46, 1
      %p50 = scmp.eq.s32.totalorder %s12, 1
      %p51 = scmp.ne.s32.totalorder %s46, %s48
      %p52 = scmp.eq.s32.totalorder %s12, 0
      %p53 = por %p51, %p52
      %p54 = scmp.ne.s32.totalorder %s46, %s48
      %p55 = scmp.eq.s32.totalorder %s17, 1
      %p56 = por %p54, %p55
      %p57 = scmp.ne.s32.totalorder %s48, %s49
      %p58 = scmp.eq.s32.totalorder %s17, 0
      %p59 = por %p57, %p58
      %p60 = scmp.ne.s32.totalorder %s48, %s49
      %p61 = scmp.eq.s32.totalorder %s18, 1
      %p62 = por %p60, %p61
      %p64 = scmp.ne.s32.totalorder %s49, %s63
      %p65 = scmp.eq.s32.totalorder %s18, 0
      %p66 = por %p64, %p65
      %s68 = sadd.s32 %s67, 1
      %p71 = scmp.eq.s32.totalorder %s12, 1
      %p72 = scmp.ne.s32.totalorder %s67, %s69
      %p73 = scmp.eq.s32.totalorder %s12, 0
      %p74 = por %p72, %p73
      %p75 = scmp.ne.s32.totalorder %s67, %s69
      %p76 = scmp.eq.s32.totalorder %s17, 1
      %p77 = por %p75, %p76
      %p78 = scmp.ne.s32.totalorder %s69, %s70
      %p79 = scmp.eq.s32.totalorder %s17, 0
      %p80 = por %p78, %p79
      %p81 = scmp.ne.s32.totalorder %s69, %s70
      %p82 = scmp.eq.s32.totalorder %s18, 1
      %p83 = por %p81, %p82
      %p85 = scmp.ne.s32.totalorder %s70, %s84
      %p86 = scmp.eq.s32.totalorder %s18, 0
      %p87 = por %p85, %p86
      %s88 = ssub.s32 %s12, %s19
      %p89 = scmp.eq.s32.totalorder %s88, 0
      %s91 = sadd.s32 %s90, 1
      %s92 = scalar_select %p89, %s90, %s91
      %p95 = pneg %p89
      %p96 = scmp.eq.s32.totalorder %s12, 1
      %p97 = por %p95, %p96
      %p98 = scmp.ne.s32.totalorder %s90, %s93
      %p99 = scmp.eq.s32.totalorder %s12, 0
      %p100 = por %p98, %p99
      %p101 = scmp.ne.s32.totalorder %s90, %s93
      %p102 = scmp.eq.s32.totalorder %s17, 1
      %p103 = por %p101, %p102
      %p104 = scmp.ne.s32.totalorder %s93, %s94
      %p105 = scmp.eq.s32.totalorder %s17, 0
      %p106 = por %p104, %p105
      %p107 = scmp.ne.s32.totalorder %s93, %s94
      %p108 = scmp.eq.s32.totalorder %s18, 1
      %p109 = por %p107, %p108
      %p111 = scmp.ne.s32.totalorder %s94, %s110
      %p112 = scmp.eq.s32.totalorder %s18, 0
      %p113 = por %p111, %p112
      %p114 = scmp.le.s32.totalorder 1, %s12
      %p115 = scmp.lt.s32.totalorder %s12, 3
      %p116 = pnand %p114, %p115
      %p117 = pneg %p116
      // Predicated region
      $region9: #{tpu_custom_call.1} parent=5 // pred_check
        _
      $region10: #{tpu_custom_call.1} parent=5 // pred_check_branch
        %119 = sbr.rel (%p116) target = $region12
      $region11: #{tpu_custom_call.1} parent=5 // pred_region
        %s120 = ssub.s32 %s12, 1
        // Predicated region
        $region13: #{tpu_custom_call.1} parent=11 // pred_check
          %p121 = pneg %p59
        $region14: #{tpu_custom_call.1} parent=11 // pred_check_branch
          %123 = sbr.rel (%p121) target = $region16
        $region15: #{tpu_custom_call.1} parent=11 // pred_region
          _
        $region16: #{tpu_custom_call.1} parent=11 // pred_fallthru
          _
        // Predicated region
        $region17: #{tpu_custom_call.1} parent=11 // pred_check
          %p124 = pneg %p80
        $region18: #{tpu_custom_call.1} parent=11 // pred_check_branch
          %126 = sbr.rel (%p124) target = $region20
        $region19: #{tpu_custom_call.1} parent=11 // pred_region
          _
        $region20: #{tpu_custom_call.1} parent=11 // pred_fallthru
          _
      $region12: #{tpu_custom_call.1} parent=5 // pred_fallthru
        _
      %p127 = scmp.lt.s32.totalorder %s12, 2
      // Predicated region
      $region21: #{tpu_custom_call.1} parent=5 // pred_check
        %p128 = pneg %p127
      $region22: #{tpu_custom_call.1} parent=5 // pred_check_branch
        %130 = sbr.rel (%p128) target = $region24
      $region23: #{tpu_custom_call.1} parent=5 // pred_region
        // Predicated region
        $region25: #{tpu_custom_call.1} parent=23 // pred_check
          %p131 = pneg %p32
        $region26: #{tpu_custom_call.1} parent=23 // pred_check_branch
          %133 = sbr.rel (%p131) target = $region28
        $region27: #{tpu_custom_call.1} parent=23 // pred_region
          %s134 = smul.u32 16, %s12
          %p135 = scmp.lt.s32.totalorder %s134, 31
          %s136 = scalar_select %p135, %s134, 31
          %s137 = smul.addr %s136, 8
          %s138 = scalar_lea.vmem %s0, %s137
          %s139 = smul.u32 16, %s12
        $region28: #{tpu_custom_call.1} parent=23 // pred_fallthru
          _
      $region24: #{tpu_custom_call.1} parent=5 // pred_fallthru
        _
      %p140 = scmp.le.s32.totalorder 1, %s12
      %p141 = scmp.lt.s32.totalorder %s12, 3
      %p142 = pnand %p140, %p141
      %p143 = pneg %p142
      // Predicated region
      $region29: #{tpu_custom_call.1} parent=5 // pred_check
        _
      $region30: #{tpu_custom_call.1} parent=5 // pred_check_branch
        %145 = sbr.rel (%p142) target = $region32
      $region31: #{tpu_custom_call.1} parent=5 // pred_region
        %s146 = ssub.s32 %s12, 1
        %s147 = smul.u32 16, %s17
        %p148 = scmp.lt.s32.totalorder %s147, 31
        %s149 = scalar_select %p148, %s147, 31
        %s150 = smul.addr %s149, 8
        %s151 = scalar_lea.vmem %s0, %s150
        %p152 = pneg %p38
        %p153 = pneg %p35
        %p154 = pneg %p59
        %p155 = pneg %p56
        %p156 = pneg %p80
        %p157 = pneg %p77
        %p158 = pneg %p106
        %p159 = pneg %p103
        %s160 = sand.u32 %s93, 1
        %s161 = scalar_lea.sflag [#allocation3], %s160
        %s162 = sand.u32 %s93, 1
        %s163 = smul.addr %s162, 384
        %s164 = scalar_lea.vmem [#allocation2], %s163
        %s165 = smul.u32 16, %s17
        %p166 = scmp.lt.s32.totalorder %s165, 31
        %s167 = scalar_select %p166, %s165, 31
        %s168 = smul.addr %s167, 8
        %s169 = scalar_lea.vmem %s0, %s168
        %s170 = smul.u32 16, %s17
        %s171 = smul.u32 16, %s17
        %v172 = vld [vmem:[%s169] sm:$0xff]
        %v173 = vld [vmem:[%s169 + $0x8] sm:$0xff]
        %v174 = vld [vmem:[%s169 + $0x10] sm:$0xff]
        %v175 = vld [vmem:[%s169 + $0x18] sm:$0xff]
        %v176 = vld [vmem:[%s169 + $0x20] sm:$0xff]
        %v177 = vld [vmem:[%s169 + $0x28] sm:$0xff]
        %v178 = vld [vmem:[%s169 + $0x30] sm:$0xff]
        %v179 = vld [vmem:[%s169 + $0x38] sm:$0xff]
        %v180 = vld [vmem:[%s169 + $0x40] sm:$0xff]
        %v181 = vld [vmem:[%s169 + $0x48] sm:$0xff]
        %v182 = vld [vmem:[%s169 + $0x50] sm:$0xff]
        %v183 = vld [vmem:[%s169 + $0x58] sm:$0xff]
        %v184 = vld [vmem:[%s169 + $0x60] sm:$0xff]
        %v185 = vld [vmem:[%s169 + $0x68] sm:$0xff]
        %v186 = vld [vmem:[%s169 + $0x70] sm:$0xff]
        %v187 = vld [vmem:[%s169 + $0x78] sm:$0xff]
        %v188 = vld [vmem:[%s1] sm:$0xff]
        %v189 = vld [vmem:[%s1 + $0x8] sm:$0xff]
        %v190 = vld [vmem:[%s1 + $0x10] sm:$0xff]
        %v191 = vld [vmem:[%s1 + $0x18] sm:$0xff]
        %v192 = vld [vmem:[%s1 + $0x20] sm:$0xff]
        %v193 = vld [vmem:[%s1 + $0x28] sm:$0xff]
        %v194 = vld [vmem:[%s2] sm:$0x7]
        %v196 = vlaneseq
        %v197 = vshrl.u32 %v196, 7
        %v198 = vsub.s32 0, %v197
        %v199 = vrot.slane %v194, %v198
        %v200 = vlaneseq
        %v201 = vshrl.u32 %v200, 7
        %v202 = vsub.s32 1, %v201
        %v203 = vrot.slane %v194, %v202
        %v204 = vlaneseq
        %v205 = vshrl.u32 %v204, 7
        %v206 = vsub.s32 2, %v205
        %v207 = vrot.slane %v194, %v206
        %vm211 = vcmask 130048
        %v213 = vsel %vm211, %v172, 0
        %v216 = vsel %vm211, %v173, 0
        %v219 = vsel %vm211, %v174, 0
        %v222 = vsel %vm211, %v175, 0
        %v225 = vsel %vm211, %v176, 0
        %v228 = vsel %vm211, %v177, 0
        %v231 = vsel %vm211, %v178, 0
        %v234 = vsel %vm211, %v179, 0
        %v237 = vsel %vm211, %v180, 0
        %v240 = vsel %vm211, %v181, 0
        %v243 = vsel %vm211, %v182, 0
        %v246 = vsel %vm211, %v183, 0
        %v249 = vsel %vm211, %v184, 0
        %v252 = vsel %vm211, %v185, 0
        %v255 = vsel %vm211, %v186, 0
        %v258 = vsel %vm211, %v187, 0
        %260 = vmatprep.subr.mxu0 %v189
        %261 = vmatpush1.msra.mxu0 %v188
        %262 = vmatprep.subr.mxu0 %v192
        %263 = vmatpush1.msra.mxu0 %v191
        %264 = vmatprep.subr.mxu0 0.0
        %265 = vmatpush1.msra.mxu0 0.0
        %266 = vmatprep.subr.mxu0 0.0
        %267 = vmatpush1.msra.mxu0 0.0
        %268 = vmatprep.subr.mxu0 0.0
        %269 = vmatpush1.msra.mxu0 0.0
        %270 = vmatprep.subr.mxu0 0.0
        %271 = vmatpush1.msra.mxu0 0.0
        %272 = vmatprep.subr.mxu0 0.0
        %273 = vmatpush1.msra.mxu0 0.0
        %274 = vmatprep.subr.mxu0 0.0
        %275 = vmatpush1.msra.mxu0 0.0
        %276 = vmatprep.subr.mxu0 0.0
        %277 = vmatpush1.msra.mxu0 0.0
        %278 = vmatprep.subr.mxu0 0.0
        %279 = vmatpush1.msra.mxu0 0.0
        %280 = vmatprep.subr.mxu0 0.0
        %281 = vmatpush1.msra.mxu0 0.0
        %282 = vmatprep.subr.mxu0 0.0
        %283 = vmatpush1.msra.mxu0 0.0
        %284 = vmatprep.subr.mxu0 0.0
        %285 = vmatpush1.msra.mxu0 0.0
        %286 = vmatprep.subr.mxu0 0.0
        %287 = vmatpush1.msra.mxu0 0.0
        %288 = vmatprep.subr.mxu0 0.0
        %289 = vmatpush1.msra.mxu0 0.0
        %290 = vmatprep.subr.mxu0 0.0
        %291 = vmatpush1.msra.mxu0 0.0
        %292 = vmatprep.subr.mxu0 0.0
        %293 = vmatpush1.msra.mxu0 0.0
        %294 = vmatprep.subr.mxu0 0.0
        %295 = vmatpush1.msra.mxu0 0.0
        %296 = vmatprep.subr.mxu0 0.0
        %297 = vmatpush1.msra.mxu0 0.0
        %298 = vmatprep.subr.mxu0 0.0
        %299 = vmatpush1.msra.mxu0 0.0
        %300 = vmatprep.subr.mxu0 0.0
        %301 = vmatpush1.msra.mxu0 0.0
        %302 = vmatprep.subr.mxu0 0.0
        %303 = vmatpush1.msra.mxu0 0.0
        %304 = vmatprep.subr.mxu0 0.0
        %305 = vmatpush1.msra.mxu0 0.0
        %306 = vmatprep.subr.mxu0 0.0
        %307 = vmatpush1.msra.mxu0 0.0
        %308 = vmatprep.subr.mxu0 0.0
        %309 = vmatpush1.msra.mxu0 0.0
        %310 = vmatprep.subr.mxu0 0.0
        %311 = vmatpush1.msra.mxu0 0.0
        %312 = vmatprep.subr.mxu0 0.0
        %313 = vmatpush1.msra.mxu0 0.0
        %314 = vmatprep.subr.mxu0 0.0
        %315 = vmatpush1.msra.mxu0 0.0
        %316 = vmatprep.subr.mxu0 0.0
        %317 = vmatpush1.msra.mxu0 0.0
        %318 = vmatprep.subr.mxu0 0.0
        %319 = vmatpush1.msra.mxu0 0.0
        %320 = vmatprep.subr.mxu0 0.0
        %321 = vmatpush1.msra.mxu0 0.0
        %322 = vmatprep.subr.mxu0 0.0
        %323 = vmatpush1.msra.mxu0 0.0
        %324 = vmatprep.mubr.f32.mxu0 0.0
        %325 = vmatmul.mubr.f32.gmra.mrb[0].mxu0 %v213
        %v326 = vpop.f32.mrb[0].mxu0
        %v327 = vadd.f32 %v199, %v326
        %v328 = vpop.f32.mrb[0].mxu0
        %v329 = vadd.f32 %v203, %v328
        %330 = vmatprep.mubr.f32.mxu0 0.0
        %331 = vmatmul.mubr.f32.gmra.mrb[0].mxu0 %v216
        %v332 = vpop.f32.mrb[0].mxu0
        %v333 = vadd.f32 %v199, %v332
        %v334 = vpop.f32.mrb[0].mxu0
        %v335 = vadd.f32 %v203, %v334
        %336 = vmatprep.mubr.f32.mxu0 0.0
        %337 = vmatmul.mubr.f32.gmra.mrb[0].mxu0 %v219
        %v338 = vpop.f32.mrb[0].mxu0
        %v339 = vadd.f32 %v199, %v338
        %v340 = vpop.f32.mrb[0].mxu0
        %v341 = vadd.f32 %v203, %v340
        %342 = vmatprep.mubr.f32.mxu0 0.0
        %343 = vmatmul.mubr.f32.gmra.mrb[0].mxu0 %v222
        %v344 = vpop.f32.mrb[0].mxu0
        %v345 = vadd.f32 %v199, %v344
        %v346 = vpop.f32.mrb[0].mxu0
        %v347 = vadd.f32 %v203, %v346
        %348 = vmatprep.mubr.f32.mxu0 0.0
        %349 = vmatmul.mubr.f32.gmra.mrb[0].mxu0 %v225
        %v350 = vpop.f32.mrb[0].mxu0
        %v351 = vadd.f32 %v199, %v350
        %v352 = vpop.f32.mrb[0].mxu0
        %v353 = vadd.f32 %v203, %v352
        %354 = vmatprep.mubr.f32.mxu0 0.0
        %355 = vmatmul.mubr.f32.gmra.mrb[0].mxu0 %v228
        %v356 = vpop.f32.mrb[0].mxu0
        %v357 = vadd.f32 %v199, %v356
        %v358 = vpop.f32.mrb[0].mxu0
        %v359 = vadd.f32 %v203, %v358
        %360 = vmatprep.mubr.f32.mxu0 0.0
        %361 = vmatmul.mubr.f32.gmra.mrb[0].mxu0 %v231
        %v362 = vpop.f32.mrb[0].mxu0
        %v363 = vadd.f32 %v199, %v362
        %v364 = vpop.f32.mrb[0].mxu0
        %v365 = vadd.f32 %v203, %v364
        %366 = vmatprep.mubr.f32.mxu0 0.0
        %367 = vmatmul.mubr.f32.gmra.mrb[0].mxu0 %v234
        %v368 = vpop.f32.mrb[0].mxu0
        %v369 = vadd.f32 %v199, %v368
        %v370 = vpop.f32.mrb[0].mxu0
        %v371 = vadd.f32 %v203, %v370
        %372 = vmatprep.mubr.f32.mxu0 0.0
        %373 = vmatmul.mubr.f32.gmra.mrb[0].mxu0 %v237
        %v374 = vpop.f32.mrb[0].mxu0
        %v375 = vadd.f32 %v199, %v374
        %v376 = vpop.f32.mrb[0].mxu0
        %v377 = vadd.f32 %v203, %v376
        %378 = vmatprep.mubr.f32.mxu0 0.0
        %379 = vmatmul.mubr.f32.gmra.mrb[0].mxu0 %v240
        %v380 = vpop.f32.mrb[0].mxu0
        %v381 = vadd.f32 %v199, %v380
        %v382 = vpop.f32.mrb[0].mxu0
        %v383 = vadd.f32 %v203, %v382
        %384 = vmatprep.mubr.f32.mxu0 0.0
        %385 = vmatmul.mubr.f32.gmra.mrb[0].mxu0 %v243
        %v386 = vpop.f32.mrb[0].mxu0
        %v387 = vadd.f32 %v199, %v386
        %v388 = vpop.f32.mrb[0].mxu0
        %v389 = vadd.f32 %v203, %v388
        %390 = vmatprep.mubr.f32.mxu0 0.0
        %391 = vmatmul.mubr.f32.gmra.mrb[0].mxu0 %v246
        %v392 = vpop.f32.mrb[0].mxu0
        %v393 = vadd.f32 %v199, %v392
        %v394 = vpop.f32.mrb[0].mxu0
        %v395 = vadd.f32 %v203, %v394
        %396 = vmatprep.mubr.f32.mxu0 0.0
        %397 = vmatmul.mubr.f32.gmra.mrb[0].mxu0 %v249
        %v398 = vpop.f32.mrb[0].mxu0
        %v399 = vadd.f32 %v199, %v398
        %v400 = vpop.f32.mrb[0].mxu0
        %v401 = vadd.f32 %v203, %v400
        %402 = vmatprep.mubr.f32.mxu0 0.0
        %403 = vmatmul.mubr.f32.gmra.mrb[0].mxu0 %v252
        %v404 = vpop.f32.mrb[0].mxu0
        %v405 = vadd.f32 %v199, %v404
        %v406 = vpop.f32.mrb[0].mxu0
        %v407 = vadd.f32 %v203, %v406
        %408 = vmatprep.mubr.f32.mxu0 0.0
        %409 = vmatmul.mubr.f32.gmra.mrb[0].mxu0 %v255
        %v410 = vpop.f32.mrb[0].mxu0
        %v411 = vadd.f32 %v199, %v410
        %v412 = vpop.f32.mrb[0].mxu0
        %v413 = vadd.f32 %v203, %v412
        %414 = vmatprep.mubr.f32.mxu0 0.0
        %415 = vmatmul.mubr.f32.gmra.mrb[0].mxu0 %v258
        %v416 = vpop.f32.mrb[0].mxu0
        %v417 = vadd.f32 %v199, %v416
        %v418 = vpop.f32.mrb[0].mxu0
        %v419 = vadd.f32 %v203, %v418
        %420 = vdwg.mxu0
        %421 = vmatprep.subr.mxu0 0.0
        %422 = vmatpush1.msra.mxu0 %v190
        %423 = vmatprep.subr.mxu0 0.0
        %424 = vmatpush1.msra.mxu0 %v193
        %425 = vmatprep.subr.mxu0 0.0
        %426 = vmatpush1.msra.mxu0 0.0
        %427 = vmatprep.subr.mxu0 0.0
        %428 = vmatpush1.msra.mxu0 0.0
        %429 = vmatprep.subr.mxu0 0.0
        %430 = vmatpush1.msra.mxu0 0.0
        %431 = vmatprep.subr.mxu0 0.0
        %432 = vmatpush1.msra.mxu0 0.0
        %433 = vmatprep.subr.mxu0 0.0
        %434 = vmatpush1.msra.mxu0 0.0
        %435 = vmatprep.subr.mxu0 0.0
        %436 = vmatpush1.msra.mxu0 0.0
        %437 = vmatprep.subr.mxu0 0.0
        %438 = vmatpush1.msra.mxu0 0.0
        %439 = vmatprep.subr.mxu0 0.0
        %440 = vmatpush1.msra.mxu0 0.0
        %441 = vmatprep.subr.mxu0 0.0
        %442 = vmatpush1.msra.mxu0 0.0
        %443 = vmatprep.subr.mxu0 0.0
        %444 = vmatpush1.msra.mxu0 0.0
        %445 = vmatprep.subr.mxu0 0.0
        %446 = vmatpush1.msra.mxu0 0.0
        %447 = vmatprep.subr.mxu0 0.0
        %448 = vmatpush1.msra.mxu0 0.0
        %449 = vmatprep.subr.mxu0 0.0
        %450 = vmatpush1.msra.mxu0 0.0
        %451 = vmatprep.subr.mxu0 0.0
        %452 = vmatpush1.msra.mxu0 0.0
        %453 = vmatprep.subr.mxu0 0.0
        %454 = vmatpush1.msra.mxu0 0.0
        %455 = vmatprep.subr.mxu0 0.0
        %456 = vmatpush1.msra.mxu0 0.0
        %457 = vmatprep.subr.mxu0 0.0
        %458 = vmatpush1.msra.mxu0 0.0
        %459 = vmatprep.subr.mxu0 0.0
        %460 = vmatpush1.msra.mxu0 0.0
        %461 = vmatprep.subr.mxu0 0.0
        %462 = vmatpush1.msra.mxu0 0.0
        %463 = vmatprep.subr.mxu0 0.0
        %464 = vmatpush1.msra.mxu0 0.0
        %465 = vmatprep.subr.mxu0 0.0
        %466 = vmatpush1.msra.mxu0 0.0
        %467 = vmatprep.subr.mxu0 0.0
        %468 = vmatpush1.msra.mxu0 0.0
        %469 = vmatprep.subr.mxu0 0.0
        %470 = vmatpush1.msra.mxu0 0.0
        %471 = vmatprep.subr.mxu0 0.0
        %472 = vmatpush1.msra.mxu0 0.0
        %473 = vmatprep.subr.mxu0 0.0
        %474 = vmatpush1.msra.mxu0 0.0
        %475 = vmatprep.subr.mxu0 0.0
        %476 = vmatpush1.msra.mxu0 0.0
        %477 = vmatprep.subr.mxu0 0.0
        %478 = vmatpush1.msra.mxu0 0.0
        %479 = vmatprep.subr.mxu0 0.0
        %480 = vmatpush1.msra.mxu0 0.0
        %481 = vmatprep.subr.mxu0 0.0
        %482 = vmatpush1.msra.mxu0 0.0
        %483 = vmatprep.subr.mxu0 0.0
        %484 = vmatpush1.msra.mxu0 0.0
        %485 = vmatprep.mubr.f32.mxu0 0.0
        %486 = vmatmul.mubr.f32.gmra.mrb[0].mxu0 %v213
        %v487 = vpop.f32.mrb[0].mxu0
        %v488 = vadd.f32 %v207, %v487
        %v489 = vpop.f32.mrb[0].mxu0
        %490 = vmatprep.mubr.f32.mxu0 0.0
        %491 = vmatmul.mubr.f32.gmra.mrb[0].mxu0 %v216
        %v492 = vpop.f32.mrb[0].mxu0
        %v493 = vadd.f32 %v207, %v492
        %v494 = vpop.f32.mrb[0].mxu0
        %495 = vmatprep.mubr.f32.mxu0 0.0
        %496 = vmatmul.mubr.f32.gmra.mrb[0].mxu0 %v219
        %v497 = vpop.f32.mrb[0].mxu0
        %v498 = vadd.f32 %v207, %v497
        %v499 = vpop.f32.mrb[0].mxu0
        %500 = vmatprep.mubr.f32.mxu0 0.0
        %501 = vmatmul.mubr.f32.gmra.mrb[0].mxu0 %v222
        %v502 = vpop.f32.mrb[0].mxu0
        %v503 = vadd.f32 %v207, %v502
        %v504 = vpop.f32.mrb[0].mxu0
        %505 = vmatprep.mubr.f32.mxu0 0.0
        %506 = vmatmul.mubr.f32.gmra.mrb[0].mxu0 %v225
        %v507 = vpop.f32.mrb[0].mxu0
        %v508 = vadd.f32 %v207, %v507
        %v509 = vpop.f32.mrb[0].mxu0
        %510 = vmatprep.mubr.f32.mxu0 0.0
        %511 = vmatmul.mubr.f32.gmra.mrb[0].mxu0 %v228
        %v512 = vpop.f32.mrb[0].mxu0
        %v513 = vadd.f32 %v207, %v512
        %v514 = vpop.f32.mrb[0].mxu0
        %515 = vmatprep.mubr.f32.mxu0 0.0
        %516 = vmatmul.mubr.f32.gmra.mrb[0].mxu0 %v231
        %v517 = vpop.f32.mrb[0].mxu0
        %v518 = vadd.f32 %v207, %v517
        %v519 = vpop.f32.mrb[0].mxu0
        %520 = vmatprep.mubr.f32.mxu0 0.0
        %521 = vmatmul.mubr.f32.gmra.mrb[0].mxu0 %v234
        %v522 = vpop.f32.mrb[0].mxu0
        %v523 = vadd.f32 %v207, %v522
        %v524 = vpop.f32.mrb[0].mxu0
        %525 = vmatprep.mubr.f32.mxu0 0.0
        %526 = vmatmul.mubr.f32.gmra.mrb[0].mxu0 %v237
        %v527 = vpop.f32.mrb[0].mxu0
        %v528 = vadd.f32 %v207, %v527
        %v529 = vpop.f32.mrb[0].mxu0
        %530 = vmatprep.mubr.f32.mxu0 0.0
        %531 = vmatmul.mubr.f32.gmra.mrb[0].mxu0 %v240
        %v532 = vpop.f32.mrb[0].mxu0
        %v533 = vadd.f32 %v207, %v532
        %v534 = vpop.f32.mrb[0].mxu0
        %535 = vmatprep.mubr.f32.mxu0 0.0
        %536 = vmatmul.mubr.f32.gmra.mrb[0].mxu0 %v243
        %v537 = vpop.f32.mrb[0].mxu0
        %v538 = vadd.f32 %v207, %v537
        %v539 = vpop.f32.mrb[0].mxu0
        %540 = vmatprep.mubr.f32.mxu0 0.0
        %541 = vmatmul.mubr.f32.gmra.mrb[0].mxu0 %v246
        %v542 = vpop.f32.mrb[0].mxu0
        %v543 = vadd.f32 %v207, %v542
        %v544 = vpop.f32.mrb[0].mxu0
        %545 = vmatprep.mubr.f32.mxu0 0.0
        %546 = vmatmul.mubr.f32.gmra.mrb[0].mxu0 %v249
        %v547 = vpop.f32.mrb[0].mxu0
        %v548 = vadd.f32 %v207, %v547
        %v549 = vpop.f32.mrb[0].mxu0
        %550 = vmatprep.mubr.f32.mxu0 0.0
        %551 = vmatmul.mubr.f32.gmra.mrb[0].mxu0 %v252
        %v552 = vpop.f32.mrb[0].mxu0
        %v553 = vadd.f32 %v207, %v552
        %v554 = vpop.f32.mrb[0].mxu0
        %555 = vmatprep.mubr.f32.mxu0 0.0
        %556 = vmatmul.mubr.f32.gmra.mrb[0].mxu0 %v255
        %v557 = vpop.f32.mrb[0].mxu0
        %v558 = vadd.f32 %v207, %v557
        %v559 = vpop.f32.mrb[0].mxu0
        %560 = vmatprep.mubr.f32.mxu0 0.0
        %561 = vmatmul.mubr.f32.gmra.mrb[0].mxu0 %v258
        %v562 = vpop.f32.mrb[0].mxu0
        %v563 = vadd.f32 %v207, %v562
        %v564 = vpop.f32.mrb[0].mxu0
        %565 = vdwg.mxu0
        %566 = vst [vmem:[%s164] sm:$0xff] %v327
        %567 = vst [vmem:[%s164 + $0x8] sm:$0xff] %v329
        %568 = vst [vmem:[%s164 + $0x10] sm:$0xff] %v488
        %569 = vst [vmem:[%s164 + $0x18] sm:$0xff] %v333
        %570 = vst [vmem:[%s164 + $0x20] sm:$0xff] %v335
        %571 = vst [vmem:[%s164 + $0x28] sm:$0xff] %v493
        %572 = vst [vmem:[%s164 + $0x30] sm:$0xff] %v339
        %573 = vst [vmem:[%s164 + $0x38] sm:$0xff] %v341
        %574 = vst [vmem:[%s164 + $0x40] sm:$0xff] %v498
        %575 = vst [vmem:[%s164 + $0x48] sm:$0xff] %v345
        %576 = vst [vmem:[%s164 + $0x50] sm:$0xff] %v347
        %577 = vst [vmem:[%s164 + $0x58] sm:$0xff] %v503
        %578 = vst [vmem:[%s164 + $0x60] sm:$0xff] %v351
        %579 = vst [vmem:[%s164 + $0x68] sm:$0xff] %v353
        %580 = vst [vmem:[%s164 + $0x70] sm:$0xff] %v508
        %581 = vst [vmem:[%s164 + $0x78] sm:$0xff] %v357
        %582 = vst [vmem:[%s164 + $0x80] sm:$0xff] %v359
        %583 = vst [vmem:[%s164 + $0x88] sm:$0xff] %v513
        %584 = vst [vmem:[%s164 + $0x90] sm:$0xff] %v363
        %585 = vst [vmem:[%s164 + $0x98] sm:$0xff] %v365
        %586 = vst [vmem:[%s164 + $0xa0] sm:$0xff] %v518
        %587 = vst [vmem:[%s164 + $0xa8] sm:$0xff] %v369
        %588 = vst [vmem:[%s164 + $0xb0] sm:$0xff] %v371
        %589 = vst [vmem:[%s164 + $0xb8] sm:$0xff] %v523
        %590 = vst [vmem:[%s164 + $0xc0] sm:$0xff] %v375
        %591 = vst [vmem:[%s164 + $0xc8] sm:$0xff] %v377
        %592 = vst [vmem:[%s164 + $0xd0] sm:$0xff] %v528
        %593 = vst [vmem:[%s164 + $0xd8] sm:$0xff] %v381
        %594 = vst [vmem:[%s164 + $0xe0] sm:$0xff] %v383
        %595 = vst [vmem:[%s164 + $0xe8] sm:$0xff] %v533
        %596 = vst [vmem:[%s164 + $0xf0] sm:$0xff] %v387
        %597 = vst [vmem:[%s164 + $0xf8] sm:$0xff] %v389
        %598 = vst [vmem:[%s164 + $0x100] sm:$0xff] %v538
        %599 = vst [vmem:[%s164 + $0x108] sm:$0xff] %v393
        %600 = vst [vmem:[%s164 + $0x110] sm:$0xff] %v395
        %601 = vst [vmem:[%s164 + $0x118] sm:$0xff] %v543
        %602 = vst [vmem:[%s164 + $0x120] sm:$0xff] %v399
        %603 = vst [vmem:[%s164 + $0x128] sm:$0xff] %v401
        %604 = vst [vmem:[%s164 + $0x130] sm:$0xff] %v548
        %605 = vst [vmem:[%s164 + $0x138] sm:$0xff] %v405
        %606 = vst [vmem:[%s164 + $0x140] sm:$0xff] %v407
        %607 = vst [vmem:[%s164 + $0x148] sm:$0xff] %v553
        %608 = vst [vmem:[%s164 + $0x150] sm:$0xff] %v411
        %609 = vst [vmem:[%s164 + $0x158] sm:$0xff] %v413
        %610 = vst [vmem:[%s164 + $0x160] sm:$0xff] %v558
        %611 = vst [vmem:[%s164 + $0x168] sm:$0xff] %v417
        %612 = vst [vmem:[%s164 + $0x170] sm:$0xff] %v419
        %613 = vst [vmem:[%s164 + $0x178] sm:$0xff] %v563
        %s614 = sand.u32 %s93, 1
        %s615 = scalar_lea.sflag [#allocation3], %s614
        %s616 = sand.u32 %s93, 1
        %s617 = smul.addr %s616, 384
        %s618 = scalar_lea.vmem [#allocation2], %s617
        // Predicated region
        $region33: #{tpu_custom_call.1} parent=31 // pred_check
          %p619 = pneg %p103
        $region34: #{tpu_custom_call.1} parent=31 // pred_check_branch
          %621 = sbr.rel (%p619) target = $region36
        $region35: #{tpu_custom_call.1} parent=31 // pred_region
          %s622 = smul.u32 16, %s17
          %s624 = ssub.s32 6144, 6144
          %625 = vsyncadd %s615, %s624
          %s626 = smul.addr %s622, 3
          %s627 = smul.addr %s626, 128
          %s628 = scalar_lea.hbm %s3, %s627
          %s629 = sshll.u32 %s618, 4
          %s630 = int_to_ptr.vmem [resolvable:$true] %s629
          %635 = dma.vmem_to_hbm [thread:$0]  %s630, 6144, %s628, %s615, 384, 384, 24
        $region36: #{tpu_custom_call.1} parent=31 // pred_fallthru
          _
      $region32: #{tpu_custom_call.1} parent=5 // pred_fallthru
        _
      %p636 = scmp.le.s32.totalorder 2, %s12
      // Predicated region
      $region37: #{tpu_custom_call.1} parent=5 // pred_check
        %p637 = pneg %p636
      $region38: #{tpu_custom_call.1} parent=5 // pred_check_branch
        %639 = sbr.rel (%p637) target = $region40
      $region39: #{tpu_custom_call.1} parent=5 // pred_region
        %s640 = ssub.s32 %s12, 2
        // Predicated region
        $region41: #{tpu_custom_call.1} parent=39 // pred_check
          %p641 = pneg %p109
        $region42: #{tpu_custom_call.1} parent=39 // pred_check_branch
          %643 = sbr.rel (%p641) target = $region44
        $region43: #{tpu_custom_call.1} parent=39 // pred_region
          %s644 = sand.u32 %s94, 1
          %s645 = scalar_lea.sflag [#allocation3], %s644
          %s646 = sand.u32 %s94, 1
          %s647 = smul.addr %s646, 384
          %s648 = scalar_lea.vmem [#allocation2], %s647
          %649 = dma.done %s645, 6144
        $region44: #{tpu_custom_call.1} parent=39 // pred_fallthru
          _
      $region40: #{tpu_custom_call.1} parent=5 // pred_fallthru
        _
    $region6: #{tpu_custom_call.1} parent=1 // loop_footer
      %s16 = sadd.s32 1, %s12
    $region7: #{tpu_custom_call.1} parent=1 // loop_footer_branch
      %11 = sbr.rel target = $region3
    $region8: #{tpu_custom_call.1} parent=1 // loop_exit
      _
    %650 = vsyncpa [#allocation3], 1
    %s651 = scalar_lea.sflag [#allocation3], 1
    %652 = vsyncpa %s651, 1

</llo_original>
